<compile_context>
chip_gen: v5e
topology: v5e:2x2
jax: 0.10.0
libtpu: 0.0.40
codegen_flags: <defaults>
</compile_context>

<pallas_src>
import math

import jax
import jax.numpy as jnp
from jax.experimental import pallas as pl
from jax.experimental.pallas import tpu as pltpu

_LANE = 128
_TILE_BYTES = 4 * 1024 * 1024  # ~4 MiB per x tile; 4 pipelined buffers ~ 16 MiB VMEM


def _drop_path_rows_kernel(coef_ref, x_ref, o_ref):
    # coef_ref: (B,) f32 in SMEM (per-sample mask / keep_prob)
    # x_ref / o_ref: (1, TR, 128) VMEM tile belonging to sample b = program_id(0)
    b = pl.program_id(0)
    c = coef_ref[b].astype(x_ref.dtype)
    o_ref[...] = x_ref[...] * c


def _drop_path_flat_kernel(coef_ref, x_ref, o_ref):
    # Fallback (flattened features not a multiple of 128).
    # coef_ref: (B, 1) f32 VMEM; x_ref / o_ref: (B, TF) tile.
    o_ref[...] = x_ref[...] * coef_ref[...].astype(x_ref.dtype)


def drop_path(x, drop_prob: float = 0.0, training: bool = False, *,
              key=None, seed: int = 0, donate: bool = False):
    """JAX/Pallas equivalent of utils.drop_path (per-sample stochastic depth).

    `drop_prob` / `training` must be static Python values (matches the PyTorch
    early-exit). Pass a fresh `key` per training step for correct statistics.
    """
    if drop_prob == 0.0 or not training:
        return x
    keep_prob = 1.0 - drop_prob

    B = x.shape[0]
    F = int(math.prod(x.shape[1:]))
    itemsize = jnp.dtype(x.dtype).itemsize

    # Per-sample keep coefficient: floor(keep_prob + U[0,1)) / keep_prob, in f32.
    # TODO(synk): enforce a fresh PRNG key per training step at the call site
    # (a static default seed reuses the same mask every call).
    if key is None:
        key = jax.random.PRNGKey(seed)
    u = jax.random.uniform(key, (B,), dtype=jnp.float32)
    coef = jnp.floor(keep_prob + u) / jnp.float32(keep_prob)

    io_alias = {1: 0} if donate else {}
    vmem_limit = 32 * 1024 * 1024

    if F % _LANE == 0:
        # --- primary path: sublane-dense (B, R, 128) layout, per-sample grid axis ---
        R = F // _LANE
        x3 = x.reshape(B, R, _LANE)
        sub = max(8, 32 // itemsize)  # sublane multiple: 8 (f32), 16 (bf16), 32 (int8)
        tr_cap = max(sub, (_TILE_BYTES // (_LANE * itemsize)) // sub * sub)
        TR = R if R <= tr_cap else tr_cap
        grid = (B, pl.cdiv(R, TR))

        out = pl.pallas_call(
            _drop_path_rows_kernel,
            out_shape=jax.ShapeDtypeStruct((B, R, _LANE), x.dtype),
            grid=grid,
            in_specs=[
                pl.BlockSpec(memory_space=pltpu.MemorySpace.SMEM),      # coef (whole)
                pl.BlockSpec((1, TR, _LANE), lambda b, r: (b, r, 0)),   # x tile
            ],
            out_specs=pl.BlockSpec((1, TR, _LANE), lambda b, r: (b, r, 0)),
            compiler_params=pltpu.CompilerParams(
                dimension_semantics=("parallel", "parallel"),
                vmem_limit_bytes=vmem_limit,
            ),
            input_output_aliases=io_alias,
        )(coef, x3)
        return out.reshape(x.shape)

    # --- fallback path: ragged feature count, lane-dense (B, TF) tiles, no padding ---
    xf = x.reshape(B, F)
    tf_cap = max(_LANE, (_TILE_BYTES // max(B * itemsize, 1)) // _LANE * _LANE)
    TF = F if F <= tf_cap else tf_cap
    grid = (pl.cdiv(F, TF),)  # Pallas masks the ragged final block.
    coef2 = coef.reshape(B, 1)

    out = pl.pallas_call(
        _drop_path_flat_kernel,
        out_shape=jax.ShapeDtypeStruct((B, F), x.dtype),
        grid=grid,
        in_specs=[
            pl.BlockSpec((B, 1), lambda j: (0, 0)),
            pl.BlockSpec((B, TF), lambda j: (0, j)),
        ],
        out_specs=pl.BlockSpec((B, TF), lambda j: (0, j)),
        compiler_params=pltpu.CompilerParams(
            dimension_semantics=("parallel",),
            vmem_limit_bytes=vmem_limit,
        ),
        input_output_aliases=io_alias,
    )(coef2, xf)
    return out.reshape(x.shape)


class DropPath:
    """Mirror of the PyTorch DropPath module (no learnable parameters)."""

    def __init__(self, drop_prob=None):
        self.drop_prob = drop_prob
        self.training = True

    def __call__(self, x, *, key=None, seed: int = 0):
        return drop_path(
            x,
            self.drop_prob if self.drop_prob is not None else 0.0,
            self.training,
            key=key,
            seed=seed,
        )


if __name__ == "__main__":
    key = jax.random.PRNGKey(0)
    kx, kx2, kd = jax.random.split(key, 3)
    x = jax.random.normal(kx, (2, 4, 16, 16), dtype=jnp.float32)  # NCHW, F=1024

    module = DropPath(drop_prob=0.5)
    module.training = True
    keep_prob = 1.0 - 0.5

    # Primary (sublane-dense) path.
    out = jax.block_until_ready(module(x, key=kd))
    assert out.shape == x.shape and out.dtype == x.dtype
    for b in range(x.shape[0]):
        xb, ob = x[b], out[b]
        is_zero = bool(jnp.all(ob == 0.0))
        is_scaled = bool(jnp.allclose(ob, xb / keep_prob, rtol=1e-5, atol=1e-5))
        assert is_zero or is_scaled, "per-sample drop-path semantics violated"

    # Ragged-feature fallback path (F = 105, not a multiple of 128).
    x2 = jax.random.normal(kx2, (2, 3, 5, 7), dtype=jnp.float32)
    out2 = jax.block_until_ready(module(x2, seed=7))
    assert out2.shape == x2.shape
    for b in range(x2.shape[0]):
        xb, ob = x2[b], out2[b]
        is_zero = bool(jnp.all(ob == 0.0))
        is_scaled = bool(jnp.allclose(ob, xb / keep_prob, rtol=1e-5, atol=1e-5))
        assert is_zero or is_scaled, "fallback drop-path semantics violated"

    # Eval mode / drop_prob=0 path: identity.
    module.training = False
    out_eval = jax.block_until_ready(module(x))
    assert bool(jnp.all(out_eval == x))

    print("KERNEL_OK")
</pallas_src>

<mosaic_0001>
module attributes {stable_mosaic.version = 11 : i64} {
  func.func @_drop_path_rows_kernel(%arg0: i32, %arg1: i32, %arg2: memref<2xf32, #tpu.memory_space<smem>>, %arg3: memref<1x8x128xf32, #tpu.memory_space<vmem>>, %arg4: memref<1x8x128xf32, #tpu.memory_space<vmem>>) attributes {dimension_semantics = [#tpu.dimension_semantics<parallel>, #tpu.dimension_semantics<parallel>], iteration_bounds = array<i64: 2, 1>, scalar_prefetch = 0 : i64, scratch_operands = 0 : i64, tpu.core_type = #tpu.core_type<tc>, window_params = [{transform_indices = @transform_0, window_bounds = array<i64: 2>}, {transform_indices = @transform_1, window_bounds = array<i64: 1, 8, 128>}, {transform_indices = @transform_2, window_bounds = array<i64: 1, 8, 128>}]} {
    %0 = arith.index_cast %arg0 : i32 to index
    %1 = memref.load %arg2[%0] : memref<2xf32, #tpu.memory_space<smem>>
    %c0 = arith.constant 0 : index
    %c0_0 = arith.constant 0 : index
    %c0_1 = arith.constant 0 : index
    %2 = vector.load %arg3[%c0, %c0_0, %c0_1] : memref<1x8x128xf32, #tpu.memory_space<vmem>>, vector<1x8x128xf32>
    %3 = vector.broadcast %1 : f32 to vector<1x8x128xf32>
    %4 = arith.mulf %2, %3 : vector<1x8x128xf32>
    %c0_2 = arith.constant 0 : index
    %c0_3 = arith.constant 0 : index
    %c0_4 = arith.constant 0 : index
    %5 = vector.load %arg4[%c0_2, %c0_3, %c0_4] : memref<1x8x128xf32, #tpu.memory_space<vmem>>, vector<1x8x128xf32>
    tpu.vector_store %arg4[%c0_2, %c0_3, %c0_4], %4 {strides = array<i32>} : memref<1x8x128xf32, #tpu.memory_space<vmem>>, vector<1x8x128xf32>,
    return
  }
  func.func @transform_0(%arg0: i32, %arg1: i32) -> i32 {
    %c0_i32 = arith.constant 0 : i32
    %c0_i32_0 = arith.constant 0 : i32
    return %c0_i32 : i32
  }
  func.func @transform_1(%arg0: i32, %arg1: i32) -> (i32, i32, i32) {
    %c0_i32 = arith.constant 0 : i32
    %c0_i32_0 = arith.constant 0 : i32
    return %arg0, %arg1, %c0_i32 : i32, i32, i32
  }
  func.func @transform_2(%arg0: i32, %arg1: i32) -> (i32, i32, i32) {
    %c0_i32 = arith.constant 0 : i32
    %c0_i32_0 = arith.constant 0 : i32
    return %arg0, %arg1, %c0_i32 : i32, i32, i32
  }
}

</mosaic_0001>

<llo_original>
// kernel: tpu_custom_call.1
$region0: #{tpu_custom_call.1}
  #allocation0 [shape = 'u32[]', space=smem, size = 0x4, offset = 0x4, fixed_abs, tag = 'smem constant byte address 0x4 - core index']
  #allocation1 [shape = 'u32[72,128]{1,0:T(1,128)}', space=vmem, size = 0x9000, scoped, tag = 'internal scratch']
  %s0 = inlined_call_operand.hbm [shape: f32[2], index: 0, kind: input, shape index: {}]
  %s1 = inlined_call_operand.hbm [shape: f32[2,8,128], index: 1, kind: input, shape index: {}]
  %s2 = inlined_call_operand.hbm [shape: f32[2,8,128], index: 2, kind: output, shape index: {}]
  %s3 = sld [smem:[#allocation0]]
  $region49: #{tpu_custom_call.1} parent=0
    _
  %s5 = ssub.s32 1, %s3
  %s6 = scalar_select 0, %s5, %s3
  $region1: #{tpu_custom_call.1} parent=0
    #allocation2 [shape = 'u8[512]{0}', space=smem, size = 0x200, scoped, tag = 'input window, operand 0, single buffered']
    #allocation3 [shape = 's32[2]{0}', space=sflag, size = 0x8, scoped, tag = 'scoped memory for tpu_custom_call.1']
    #allocation4 [shape = 's32[2]{0}', space=sflag, size = 0x8, scoped, tag = 'scoped memory for tpu_custom_call.1']
    #allocation5 [shape = 's32[2]{0}', space=sflag, size = 0x8, scoped, tag = 'scoped memory for tpu_custom_call.1']
    #allocation6 [shape = 'u8[8192]{0}', space=vmem, size = 0x2000, scoped, tag = 'input window, operand 1']
    #allocation7 [shape = 'u8[8192]{0}', space=vmem, size = 0x2000, scoped, tag = 'output window, operand 0']
    %7 = vsyncpa [#allocation5], 0
    %8 = vsyncpa [#allocation3], 0
    %s9 = scalar_lea.sflag [#allocation3], 1
    %10 = vsyncpa %s9, 0
    %11 = vsyncpa [#allocation4], 0
    %s12 = scalar_lea.sflag [#allocation4], 1
    %13 = vsyncpa %s12, 0
    loop: start=0, step=1, limit=4
    $region2: #{tpu_custom_call.1} parent=1 // loop_pre_header
      _
    $region3: #{tpu_custom_call.1} parent=1 // loop_header
      %s15 = sphi 0, %s19
      %p16 = scmp.ge.s32.totalorder %s15, 4
      %s22 = sphi 0, %s34
      %s23 = sphi 0, %s30
      %s24 = sphi 0, %s22
      %s25 = sphi 0, %s23
      %s26 = sphi 0, %s24
      %s27 = sphi 0, %s25
      %s35 = sphi 0, %s35
      %s37 = sphi 0, %s35
      %s38 = sphi 0, %s37
      %s52 = sphi 0, %s38
      %s60 = sphi 0, %s62
      %s63 = sphi 0, %s60
      %s64 = sphi 0, %s63
      %s80 = sphi 0, %s64
      %s88 = sphi 0, %s90
      %s91 = sphi 0, %s88
      %s92 = sphi 0, %s91
      %s108 = sphi 0, %s92
    $region4: #{tpu_custom_call.1} parent=1 // loop_header_branch
      %18 = sbr.rel (%p16) target = $region8
    $region5: #{tpu_custom_call.1} parent=1 // loop_body
      %s20 = ssub.s32 %s15, 1
      %s21 = ssub.s32 %s15, 2
      %s28 = sadd.s32 1, %s23
      %p29 = scmp.ge.s32.totalorder %s28, 1
      %s30 = scalar_select %p29, 0, %s28
      %s31 = sadd.s32 1, %s22
      %s32 = scalar_select %p29, %s31, %s22
      %p33 = scmp.ge.s32.totalorder %s32, 2
      %s34 = scalar_select %p33, 0, %s32
      %s36 = sadd.s32 %s35, 1
      %p39 = scmp.eq.s32.totalorder %s15, 1
      %p40 = scmp.ne.s32.totalorder %s35, %s37
      %p41 = scmp.eq.s32.totalorder %s15, 0
      %p42 = por %p40, %p41
      %p43 = scmp.ne.s32.totalorder %s35, %s37
      %p44 = scmp.eq.s32.totalorder %s20, 1
      %p45 = por %p43, %p44
      %p46 = scmp.ne.s32.totalorder %s37, %s38
      %p47 = scmp.eq.s32.totalorder %s20, 0
      %p48 = por %p46, %p47
      %p49 = scmp.ne.s32.totalorder %s37, %s38
      %p50 = scmp.eq.s32.totalorder %s21, 1
      %p51 = por %p49, %p50
      %p53 = scmp.ne.s32.totalorder %s38, %s52
      %p54 = scmp.eq.s32.totalorder %s21, 0
      %p55 = por %p53, %p54
      %s56 = ssub.s32 %s22, %s34
      %s57 = ssub.s32 %s23, %s30
      %s58 = sor.u32 %s56, %s57
      %p59 = scmp.eq.s32.totalorder %s58, 0
      %s61 = sadd.s32 %s60, 1
      %s62 = scalar_select %p59, %s60, %s61
      %p65 = pneg %p59
      %p66 = scmp.eq.s32.totalorder %s15, 1
      %p67 = por %p65, %p66
      %p68 = scmp.ne.s32.totalorder %s60, %s63
      %p69 = scmp.eq.s32.totalorder %s15, 0
      %p70 = por %p68, %p69
      %p71 = scmp.ne.s32.totalorder %s60, %s63
      %p72 = scmp.eq.s32.totalorder %s20, 1
      %p73 = por %p71, %p72
      %p74 = scmp.ne.s32.totalorder %s63, %s64
      %p75 = scmp.eq.s32.totalorder %s20, 0
      %p76 = por %p74, %p75
      %p77 = scmp.ne.s32.totalorder %s63, %s64
      %p78 = scmp.eq.s32.totalorder %s21, 1
      %p79 = por %p77, %p78
      %p81 = scmp.ne.s32.totalorder %s64, %s80
      %p82 = scmp.eq.s32.totalorder %s21, 0
      %p83 = por %p81, %p82
      %s84 = ssub.s32 %s22, %s34
      %s85 = ssub.s32 %s23, %s30
      %s86 = sor.u32 %s84, %s85
      %p87 = scmp.eq.s32.totalorder %s86, 0
      %s89 = sadd.s32 %s88, 1
      %s90 = scalar_select %p87, %s88, %s89
      %p93 = pneg %p87
      %p94 = scmp.eq.s32.totalorder %s15, 1
      %p95 = por %p93, %p94
      %p96 = scmp.ne.s32.totalorder %s88, %s91
      %p97 = scmp.eq.s32.totalorder %s15, 0
      %p98 = por %p96, %p97
      %p99 = scmp.ne.s32.totalorder %s88, %s91
      %p100 = scmp.eq.s32.totalorder %s20, 1
      %p101 = por %p99, %p100
      %p102 = scmp.ne.s32.totalorder %s91, %s92
      %p103 = scmp.eq.s32.totalorder %s20, 0
      %p104 = por %p102, %p103
      %p105 = scmp.ne.s32.totalorder %s91, %s92
      %p106 = scmp.eq.s32.totalorder %s21, 1
      %p107 = por %p105, %p106
      %p109 = scmp.ne.s32.totalorder %s92, %s108
      %p110 = scmp.eq.s32.totalorder %s21, 0
      %p111 = por %p109, %p110
      %p112 = scmp.le.s32.totalorder 1, %s15
      %p113 = scmp.lt.s32.totalorder %s15, 3
      %p114 = pnand %p112, %p113
      %p115 = pneg %p114
      // Predicated region
      $region9: #{tpu_custom_call.1} parent=5 // pred_check
        _
      $region10: #{tpu_custom_call.1} parent=5 // pred_check_branch
        %117 = sbr.rel (%p114) target = $region12
      $region11: #{tpu_custom_call.1} parent=5 // pred_region
        %s118 = ssub.s32 %s15, 1
        // Predicated region
        $region13: #{tpu_custom_call.1} parent=11 // pred_check
          %p119 = pneg %p48
        $region14: #{tpu_custom_call.1} parent=11 // pred_check_branch
          %121 = sbr.rel (%p119) target = $region16
        $region15: #{tpu_custom_call.1} parent=11 // pred_region
          %123 = vsyncadd [#allocation5], 0
          %s125 = sshll.u32 %s0, 4
          %s126 = int_to_ptr.hbm [resolvable:$true] %s125
          %128 = dma.hbm_to_smem %s126, 16, [#allocation2], [#allocation5]
        $region16: #{tpu_custom_call.1} parent=11 // pred_fallthru
          _
      $region12: #{tpu_custom_call.1} parent=5 // pred_fallthru
        _
      %p129 = scmp.lt.s32.totalorder %s15, 2
      // Predicated region
      $region17: #{tpu_custom_call.1} parent=5 // pred_check
        %p130 = pneg %p129
      $region18: #{tpu_custom_call.1} parent=5 // pred_check_branch
        %132 = sbr.rel (%p130) target = $region20
      $region19: #{tpu_custom_call.1} parent=5 // pred_region
        // Predicated region
        $region21: #{tpu_custom_call.1} parent=19 // pred_check
          %p133 = pneg %p70
        $region22: #{tpu_custom_call.1} parent=19 // pred_check_branch
          %135 = sbr.rel (%p133) target = $region24
        $region23: #{tpu_custom_call.1} parent=19 // pred_region
          %s136 = sand.u32 %s60, 1
          %s137 = scalar_lea.sflag [#allocation3], %s136
          %s138 = sand.u32 %s60, 1
          %s139 = smul.addr %s138, 8
          %s140 = scalar_lea.vmem [#allocation6], %s139
          %142 = vsyncadd %s137, 0
          %s143 = sadd.s32 %s23, %s22
          %s144 = smul.addr %s143, 8
          %s145 = scalar_lea.hbm %s1, %s144
          %s147 = sshll.u32 %s145, 4
          %s148 = int_to_ptr.hbm [resolvable:$true] %s147
          %s149 = sshll.u32 %s140, 4
          %s150 = int_to_ptr.vmem [resolvable:$true] %s149
          %152 = dma.hbm_to_vmem [thread:$0]  %s148, 128, %s150, %s137
        $region24: #{tpu_custom_call.1} parent=19 // pred_fallthru
          _
      $region20: #{tpu_custom_call.1} parent=5 // pred_fallthru
        _
      %p153 = scmp.le.s32.totalorder 1, %s15
      %p154 = scmp.lt.s32.totalorder %s15, 3
      %p155 = pnand %p153, %p154
      %p156 = pneg %p155
      // Predicated region
      $region25: #{tpu_custom_call.1} parent=5 // pred_check
        _
      $region26: #{tpu_custom_call.1} parent=5 // pred_check_branch
        %158 = sbr.rel (%p155) target = $region28
      $region27: #{tpu_custom_call.1} parent=5 // pred_region
        %s159 = ssub.s32 %s15, 1
        // Predicated region
        $region29: #{tpu_custom_call.1} parent=27 // pred_check
          %p160 = pneg %p48
        $region30: #{tpu_custom_call.1} parent=27 // pred_check_branch
          %162 = sbr.rel (%p160) target = $region32
        $region31: #{tpu_custom_call.1} parent=27 // pred_region
          %164 = dma.done [#allocation5], 16
        $region32: #{tpu_custom_call.1} parent=27 // pred_fallthru
          _
        %s165 = sand.u32 %s63, 1
        %s166 = scalar_lea.sflag [#allocation3], %s165
        %s167 = sand.u32 %s63, 1
        %s168 = smul.addr %s167, 8
        %s169 = scalar_lea.vmem [#allocation6], %s168
        // Predicated region
        $region33: #{tpu_custom_call.1} parent=27 // pred_check
          %p170 = pneg %p76
        $region34: #{tpu_custom_call.1} parent=27 // pred_check_branch
          %172 = sbr.rel (%p170) target = $region36
        $region35: #{tpu_custom_call.1} parent=27 // pred_region
          %174 = dma.done %s166, 128
        $region36: #{tpu_custom_call.1} parent=27 // pred_fallthru
          _
        %175 = sfence
        %p176 = pneg %p48
        %p177 = pneg %p45
        %s178 = sand.u32 %s63, 1
        %s179 = scalar_lea.sflag [#allocation3], %s178
        %s180 = sand.u32 %s63, 1
        %s181 = smul.addr %s180, 8
        %s182 = scalar_lea.vmem [#allocation6], %s181
        %p183 = pneg %p76
        %p184 = pneg %p73
        %p185 = pneg %p104
        %p186 = pneg %p101
        %s187 = sand.u32 %s91, 1
        %s188 = scalar_lea.sflag [#allocation4], %s187
        %s189 = sand.u32 %s91, 1
        %s190 = smul.addr %s189, 8
        %s191 = scalar_lea.vmem [#allocation7], %s190
        %s192 = sld [smem:[#allocation2 + %s24]]
        %v193 = vld [vmem:[%s169] sm:$0xff]
        %v194 = vstv %s192
        %v195 = vmul.f32 %v193, %v194
        %196 = vst [vmem:[%s191] sm:$0xff] %v195
        %s197 = sand.u32 %s91, 1
        %s198 = scalar_lea.sflag [#allocation4], %s197
        %s199 = sand.u32 %s91, 1
        %s200 = smul.addr %s199, 8
        %s201 = scalar_lea.vmem [#allocation7], %s200
        // Predicated region
        $region37: #{tpu_custom_call.1} parent=27 // pred_check
          %p202 = pneg %p101
        $region38: #{tpu_custom_call.1} parent=27 // pred_check_branch
          %204 = sbr.rel (%p202) target = $region40
        $region39: #{tpu_custom_call.1} parent=27 // pred_region
          %206 = vsyncadd %s198, 0
          %s207 = sadd.s32 %s25, %s24
          %s208 = smul.addr %s207, 8
          %s209 = scalar_lea.hbm %s2, %s208
          %s211 = sshll.u32 %s201, 4
          %s212 = int_to_ptr.vmem [resolvable:$true] %s211
          %s213 = sshll.u32 %s209, 4
          %s214 = int_to_ptr.hbm [resolvable:$true] %s213
          %216 = dma.vmem_to_hbm [thread:$0]  %s212, 128, %s214, %s198
        $region40: #{tpu_custom_call.1} parent=27 // pred_fallthru
          _
      $region28: #{tpu_custom_call.1} parent=5 // pred_fallthru
        _
      %p217 = scmp.le.s32.totalorder 2, %s15
      // Predicated region
      $region41: #{tpu_custom_call.1} parent=5 // pred_check
        %p218 = pneg %p217
      $region42: #{tpu_custom_call.1} parent=5 // pred_check_branch
        %220 = sbr.rel (%p218) target = $region44
      $region43: #{tpu_custom_call.1} parent=5 // pred_region
        %s221 = ssub.s32 %s15, 2
        // Predicated region
        $region45: #{tpu_custom_call.1} parent=43 // pred_check
          %p222 = pneg %p107
        $region46: #{tpu_custom_call.1} parent=43 // pred_check_branch
          %224 = sbr.rel (%p222) target = $region48
        $region47: #{tpu_custom_call.1} parent=43 // pred_region
          %s225 = sand.u32 %s92, 1
          %s226 = scalar_lea.sflag [#allocation4], %s225
          %s227 = sand.u32 %s92, 1
          %s228 = smul.addr %s227, 8
          %s229 = scalar_lea.vmem [#allocation7], %s228
          %231 = dma.done %s226, 128
        $region48: #{tpu_custom_call.1} parent=43 // pred_fallthru
          _
      $region44: #{tpu_custom_call.1} parent=5 // pred_fallthru
        _
    $region6: #{tpu_custom_call.1} parent=1 // loop_footer
      %s19 = sadd.s32 1, %s15
    $region7: #{tpu_custom_call.1} parent=1 // loop_footer_branch
      %14 = sbr.rel target = $region3
    $region8: #{tpu_custom_call.1} parent=1 // loop_exit
      _
    %232 = vsyncpa [#allocation3], 1
    %s233 = scalar_lea.sflag [#allocation3], 1
    %234 = vsyncpa %s233, 1
    %235 = vsyncpa [#allocation4], 1
    %s236 = scalar_lea.sflag [#allocation4], 1
    %237 = vsyncpa %s236, 1
    %238 = vsyncpa [#allocation5], 1
    %s239 = scalar_lea.sflag [#allocation5], 1
    %240 = vsyncpa %s239, 1

</llo_original>
